<compile_context>
chip_gen: v6e
topology: v6e:2x2x1
jax: 0.10.0
libtpu: 0.0.40
codegen_flags: <defaults>
</compile_context>

<pallas_src>
import jax
import jax.numpy as jnp
from jax.experimental import pallas as pl
from jax.experimental.pallas import tpu as pltpu


def _round_up(n, m):
    return ((n + m - 1) // m) * m


# ----------------------------- kernel ----------------------------------------

def _mlp_kernel(x_ref,
                w1_ref, b1_ref,
                w2_ref, b2_ref,
                w3_ref, b3_ref,
                s3_ref, t3_ref,
                o_ref):
    # Layer 1: linear -> relu            (BN1 folded into W2/b2; dropout = id)
    # bf16 operands, f32 MXU accumulation; bias/ReLU epilogue in f32.
    h = jnp.dot(x_ref[...], w1_ref[...], preferred_element_type=jnp.float32)
    h = jnp.maximum(h + b1_ref[...], 0.0)
    # Layer 2: linear -> relu            (BN2 folded into W3/b3)
    h = jnp.dot(h.astype(jnp.bfloat16), w2_ref[...],
                preferred_element_type=jnp.float32)
    h = jnp.maximum(h + b2_ref[...], 0.0)
    # Layer 3: linear -> relu -> BN3 affine   (dropout = id)
    h = jnp.dot(h.astype(jnp.bfloat16), w3_ref[...],
                preferred_element_type=jnp.float32)
    h = jnp.maximum(h + b3_ref[...], 0.0)
    o_ref[...] = (h * s3_ref[...] + t3_ref[...]).astype(o_ref.dtype)


# ----------------------------- wrapper ----------------------------------------

def _fold_bn_into_next(params):
    """Fold BN1 into dense2 and BN2 into dense3 (exact algebra; BN follows ReLU).

    The small fold matmuls run at HIGHEST precision so the trace-time fold
    matches PyTorch f32 eval-mode numerics.
    """
    (w1, b1, s1, t1, w2, b2, s2, t2, w3, b3, s3, t3) = params
    hp = jax.lax.Precision.HIGHEST
    w2f = s1.reshape(-1, 1) * w2                           # (H1, H2)
    b2f = jnp.dot(t1, w2, precision=hp) + b2               # (1, H2)
    w3f = s2.reshape(-1, 1) * w3                           # (H2, H3)
    b3f = jnp.dot(t2, w3, precision=hp) + b3               # (1, H3)
    return w1, b1, w2f, b2f, w3f, b3f, s3, t3


def dense1d_multi_forward(x, params):
    """x: (B, C, L) float32 -> (B, dense3) float32 (eval-mode forward)."""
    B = x.shape[0]
    x_flat = x.reshape(B, -1)                     # == x.view(x.size(0), -1)
    d_in = x_flat.shape[1]

    w1, b1, w2f, b2f, w3f, b3f, s3, t3 = _fold_bn_into_next(params)
    H1, H2, H3 = w1.shape[1], w2f.shape[1], w3f.shape[1]

    # Lane-dense hidden / output widths.  Exact: padded H1/H2 lanes hold
    # ReLU(0 + 0) = 0 and meet zero-padded weight rows downstream; padded H3
    # lanes are sliced off below.
    H1p = _round_up(max(H1, 128), 128)
    H2p = _round_up(max(H2, 128), 128)
    H3p = _round_up(max(H3, 128), 128)

    w1p = jnp.pad(w1, ((0, 0), (0, H1p - H1)))
    b1p = jnp.pad(b1, ((0, 0), (0, H1p - H1)))
    w2p = jnp.pad(w2f, ((0, H1p - H1), (0, H2p - H2)))
    b2p = jnp.pad(b2f, ((0, 0), (0, H2p - H2)))
    w3p = jnp.pad(w3f, ((0, H2p - H2), (0, H3p - H3)))
    b3p = jnp.pad(b3f, ((0, 0), (0, H3p - H3)))
    s3p = jnp.pad(s3, ((0, 0), (0, H3p - H3)))
    t3p = jnp.pad(t3, ((0, 0), (0, H3p - H3)))

    # Native MXU dtype on v5e/v6e/v7x: bf16 matmul operands, f32 accumulation.
    # TODO(synk): for v5e, prefer the producer handing x over already in bf16
    #             (and d_in padded to 128) to avoid an extra XLA HBM pass here.
    x_bf = x_flat.astype(jnp.bfloat16)
    w1p = w1p.astype(jnp.bfloat16)
    w2p = w2p.astype(jnp.bfloat16)
    w3p = w3p.astype(jnp.bfloat16)

    # Batch tile: big (<= 1024) to amortize per-grid-step overhead and improve
    # DMA burst efficiency, but at most ceil(B/2) (rounded to the bf16 sublane
    # pack of 16) so large batches produce >= 2 grid steps and the "parallel"
    # axis shards across both v7x TensorCores.
    half = _round_up(max((B + 1) // 2, 1), 16)
    TB = min(1024, half)
    B_pad = _round_up(B, TB)
    x_bf = jnp.pad(x_bf, ((0, B_pad - B), (0, 0)))

    out = pl.pallas_call(
        _mlp_kernel,
        out_shape=jax.ShapeDtypeStruct((B_pad, H3p), jnp.float32),
        grid_spec=pltpu.PrefetchScalarGridSpec(
            num_scalar_prefetch=0,
            grid=(B_pad // TB,),
            in_specs=[
                pl.BlockSpec((TB, d_in), lambda i: (i, 0)),    # x tile (bf16)
                pl.BlockSpec((d_in, H1p), lambda i: (0, 0)),   # W1 (bf16, lane-padded)
                pl.BlockSpec((1, H1p), lambda i: (0, 0)),      # b1 (f32)
                pl.BlockSpec((H1p, H2p), lambda i: (0, 0)),    # W2 (BN1 folded, bf16)
                pl.BlockSpec((1, H2p), lambda i: (0, 0)),      # b2 (BN1 folded, f32)
                pl.BlockSpec((H2p, H3p), lambda i: (0, 0)),    # W3 (BN2 folded, bf16)
                pl.BlockSpec((1, H3p), lambda i: (0, 0)),      # b3 (f32)
                pl.BlockSpec((1, H3p), lambda i: (0, 0)),      # BN3 scale (f32)
                pl.BlockSpec((1, H3p), lambda i: (0, 0)),      # BN3 shift (f32)
            ],
            out_specs=pl.BlockSpec((TB, H3p), lambda i: (i, 0)),
        ),
        compiler_params=pltpu.CompilerParams(
            dimension_semantics=("parallel",)),
    )(x_bf, w1p, b1p, w2p, b2p, w3p, b3p, s3p, t3p)

    return out[:B, :H3]


# ----------------------------- param init ------------------------------------

def _init_linear(key, fan_in, fan_out):
    """Deterministic PyTorch-style init: U(-1/sqrt(fan_in), 1/sqrt(fan_in))."""
    kw, kb = jax.random.split(key)
    bound = 1.0 / jnp.sqrt(jnp.float32(fan_in))
    w = jax.random.uniform(kw, (fan_in, fan_out), jnp.float32, -bound, bound)
    b = jax.random.uniform(kb, (1, fan_out), jnp.float32, -bound, bound)
    return w, b


def _bn_affine(num_features, eps=1e-5):
    """Eval-mode BatchNorm1d folded to per-feature affine (default stats)."""
    gamma = jnp.ones((1, num_features), jnp.float32)
    beta = jnp.zeros((1, num_features), jnp.float32)
    mean = jnp.zeros((1, num_features), jnp.float32)
    var = jnp.ones((1, num_features), jnp.float32)
    scale = gamma / jnp.sqrt(var + eps)
    shift = beta - mean * scale
    return scale, shift


if __name__ == "__main__":
    # Module hyperparameters (small, consistent with Dense1d_multi.__init__).
    channel_input, l_input = 4, 16
    layers_param = {"dense1": 128, "dense2": 64, "dense3": 32,
                    "dropout": 0.5, "batch_norm": True}
    B = 2

    key = jax.random.PRNGKey(0)
    k_x, k1, k2, k3 = jax.random.split(key, 4)

    x = jax.random.normal(k_x, (B, channel_input, l_input), jnp.float32)

    d_in = channel_input * l_input
    w1, b1 = _init_linear(k1, d_in, layers_param["dense1"])
    w2, b2 = _init_linear(k2, layers_param["dense1"], layers_param["dense2"])
    w3, b3 = _init_linear(k3, layers_param["dense2"], layers_param["dense3"])
    s1, t1 = _bn_affine(layers_param["dense1"])
    s2, t2 = _bn_affine(layers_param["dense2"])
    s3, t3 = _bn_affine(layers_param["dense3"])

    params = (w1, b1, s1, t1, w2, b2, s2, t2, w3, b3, s3, t3)

    out = jax.jit(dense1d_multi_forward)(x, params)
    out = jax.block_until_ready(out)
    assert out.shape == (B, layers_param["dense3"])

    xf = x.reshape(B, -1)
    _, _, w2f, b2f, w3f, b3f, _, _ = _fold_bn_into_next(params)

    # (1) Kernel vs. a pure-JAX evaluation with the SAME bf16-operand / f32-accum
    #     numerics (tight tolerance).
    ref = jnp.dot(xf.astype(jnp.bfloat16), w1.astype(jnp.bfloat16),
                  preferred_element_type=jnp.float32)
    ref = jnp.maximum(ref + b1, 0.0)
    ref = jnp.dot(ref.astype(jnp.bfloat16), w2f.astype(jnp.bfloat16),
                  preferred_element_type=jnp.float32)
    ref = jnp.maximum(ref + b2f, 0.0)
    ref = jnp.dot(ref.astype(jnp.bfloat16), w3f.astype(jnp.bfloat16),
                  preferred_element_type=jnp.float32)
    ref = jnp.maximum(ref + b3f, 0.0) * s3 + t3
    assert jnp.allclose(out, ref, atol=2e-3, rtol=2e-3), "kernel vs bf16 ref"

    # (2) Kernel vs. the un-folded, full-f32 PyTorch-spec math (looser tolerance
    #     accounts for the bf16 matmul operands).
    with jax.default_matmul_precision("float32"):
        spec = jnp.maximum(xf @ w1 + b1, 0.0) * s1 + t1
        spec = jnp.maximum(spec @ w2 + b2, 0.0) * s2 + t2
        spec = jnp.maximum(spec @ w3 + b3, 0.0) * s3 + t3
    assert jnp.allclose(out, spec, atol=5e-2, rtol=5e-2), "kernel vs f32 spec"

    print("KERNEL_OK")
</pallas_src>

<mosaic_0001>
module attributes {stable_mosaic.version = 11 : i64} {
  func.func @_mlp_kernel(%arg0: i32, %arg1: memref<16x64xbf16, #tpu.memory_space<vmem>>, %arg2: memref<64x128xbf16, #tpu.memory_space<vmem>>, %arg3: memref<1x128xf32, #tpu.memory_space<vmem>>, %arg4: memref<128x128xbf16, #tpu.memory_space<vmem>>, %arg5: memref<1x128xf32, #tpu.memory_space<vmem>>, %arg6: memref<128x128xbf16, #tpu.memory_space<vmem>>, %arg7: memref<1x128xf32, #tpu.memory_space<vmem>>, %arg8: memref<1x128xf32, #tpu.memory_space<vmem>>, %arg9: memref<1x128xf32, #tpu.memory_space<vmem>>, %arg10: memref<16x128xf32, #tpu.memory_space<vmem>>) attributes {dimension_semantics = [#tpu.dimension_semantics<parallel>], iteration_bounds = array<i64: 1>, scalar_prefetch = 0 : i64, scratch_operands = 0 : i64, tpu.core_type = #tpu.core_type<tc>, window_params = [{transform_indices = @transform_0, window_bounds = array<i64: 16, 64>}, {pipeline_mode = #tpu.pipeline_mode<synchronous>, transform_indices = @transform_1, window_bounds = array<i64: 64, 128>}, {pipeline_mode = #tpu.pipeline_mode<synchronous>, transform_indices = @transform_2, window_bounds = array<i64: 1, 128>}, {pipeline_mode = #tpu.pipeline_mode<synchronous>, transform_indices = @transform_3, window_bounds = array<i64: 128, 128>}, {pipeline_mode = #tpu.pipeline_mode<synchronous>, transform_indices = @transform_4, window_bounds = array<i64: 1, 128>}, {pipeline_mode = #tpu.pipeline_mode<synchronous>, transform_indices = @transform_5, window_bounds = array<i64: 128, 128>}, {pipeline_mode = #tpu.pipeline_mode<synchronous>, transform_indices = @transform_6, window_bounds = array<i64: 1, 128>}, {pipeline_mode = #tpu.pipeline_mode<synchronous>, transform_indices = @transform_7, window_bounds = array<i64: 1, 128>}, {pipeline_mode = #tpu.pipeline_mode<synchronous>, transform_indices = @transform_8, window_bounds = array<i64: 1, 128>}, {transform_indices = @transform_9, window_bounds = array<i64: 16, 128>}]} {
    %c0 = arith.constant 0 : index
    %c0_0 = arith.constant 0 : index
    %0 = vector.load %arg1[%c0, %c0_0] : memref<16x64xbf16, #tpu.memory_space<vmem>>, vector<16x64xbf16>
    %c0_1 = arith.constant 0 : index
    %c0_2 = arith.constant 0 : index
    %1 = vector.load %arg2[%c0_1, %c0_2] : memref<64x128xbf16, #tpu.memory_space<vmem>>, vector<64x128xbf16>
    %cst = arith.constant dense<0.000000e+00> : vector<16x128xf32>
    %2 = tpu.matmul %0, %1, %cst {dimension_numbers = #tpu.dot_dimension_numbers<[1], [0], [0], [1], [0, 0, 1, 1], [], []>} : vector<16x64xbf16>, vector<64x128xbf16>, vector<16x128xf32> -> vector<16x128xf32>
    %c0_3 = arith.constant 0 : index
    %c0_4 = arith.constant 0 : index
    %3 = vector.load %arg3[%c0_3, %c0_4] : memref<1x128xf32, #tpu.memory_space<vmem>>, vector<1x128xf32>
    %4 = vector.broadcast %3 : vector<1x128xf32> to vector<16x128xf32>
    %5 = arith.addf %2, %4 : vector<16x128xf32>
    %cst_5 = arith.constant 0.000000e+00 : f32
    %6 = vector.broadcast %cst_5 : f32 to vector<16x128xf32>
    %7 = arith.maximumf %5, %6 : vector<16x128xf32>
    %8 = arith.truncf %7 : vector<16x128xf32> to vector<16x128xbf16>
    %c0_6 = arith.constant 0 : index
    %c0_7 = arith.constant 0 : index
    %9 = vector.load %arg4[%c0_6, %c0_7] : memref<128x128xbf16, #tpu.memory_space<vmem>>, vector<128x128xbf16>
    %cst_8 = arith.constant dense<0.000000e+00> : vector<16x128xf32>
    %10 = tpu.matmul %8, %9, %cst_8 {dimension_numbers = #tpu.dot_dimension_numbers<[1], [0], [0], [1], [0, 0, 1, 1], [], []>} : vector<16x128xbf16>, vector<128x128xbf16>, vector<16x128xf32> -> vector<16x128xf32>
    %c0_9 = arith.constant 0 : index
    %c0_10 = arith.constant 0 : index
    %11 = vector.load %arg5[%c0_9, %c0_10] : memref<1x128xf32, #tpu.memory_space<vmem>>, vector<1x128xf32>
    %12 = vector.broadcast %11 : vector<1x128xf32> to vector<16x128xf32>
    %13 = arith.addf %10, %12 : vector<16x128xf32>
    %cst_11 = arith.constant 0.000000e+00 : f32
    %14 = vector.broadcast %cst_11 : f32 to vector<16x128xf32>
    %15 = arith.maximumf %13, %14 : vector<16x128xf32>
    %16 = arith.truncf %15 : vector<16x128xf32> to vector<16x128xbf16>
    %c0_12 = arith.constant 0 : index
    %c0_13 = arith.constant 0 : index
    %17 = vector.load %arg6[%c0_12, %c0_13] : memref<128x128xbf16, #tpu.memory_space<vmem>>, vector<128x128xbf16>
    %cst_14 = arith.constant dense<0.000000e+00> : vector<16x128xf32>
    %18 = tpu.matmul %16, %17, %cst_14 {dimension_numbers = #tpu.dot_dimension_numbers<[1], [0], [0], [1], [0, 0, 1, 1], [], []>} : vector<16x128xbf16>, vector<128x128xbf16>, vector<16x128xf32> -> vector<16x128xf32>
    %c0_15 = arith.constant 0 : index
    %c0_16 = arith.constant 0 : index
    %19 = vector.load %arg7[%c0_15, %c0_16] : memref<1x128xf32, #tpu.memory_space<vmem>>, vector<1x128xf32>
    %20 = vector.broadcast %19 : vector<1x128xf32> to vector<16x128xf32>
    %21 = arith.addf %18, %20 : vector<16x128xf32>
    %cst_17 = arith.constant 0.000000e+00 : f32
    %22 = vector.broadcast %cst_17 : f32 to vector<16x128xf32>
    %23 = arith.maximumf %21, %22 : vector<16x128xf32>
    %c0_18 = arith.constant 0 : index
    %c0_19 = arith.constant 0 : index
    %24 = vector.load %arg8[%c0_18, %c0_19] : memref<1x128xf32, #tpu.memory_space<vmem>>, vector<1x128xf32>
    %25 = vector.broadcast %24 : vector<1x128xf32> to vector<16x128xf32>
    %26 = arith.mulf %23, %25 : vector<16x128xf32>
    %c0_20 = arith.constant 0 : index
    %c0_21 = arith.constant 0 : index
    %27 = vector.load %arg9[%c0_20, %c0_21] : memref<1x128xf32, #tpu.memory_space<vmem>>, vector<1x128xf32>
    %28 = vector.broadcast %27 : vector<1x128xf32> to vector<16x128xf32>
    %29 = arith.addf %26, %28 : vector<16x128xf32>
    %c0_22 = arith.constant 0 : index
    %c0_23 = arith.constant 0 : index
    %30 = vector.load %arg10[%c0_22, %c0_23] : memref<16x128xf32, #tpu.memory_space<vmem>>, vector<16x128xf32>
    tpu.vector_store %arg10[%c0_22, %c0_23], %29 {strides = array<i32>} : memref<16x128xf32, #tpu.memory_space<vmem>>, vector<16x128xf32>,
    return
  }
  func.func @transform_0(%arg0: i32) -> (i32, i32) {
    %c0_i32 = arith.constant 0 : i32
    %c0_i32_0 = arith.constant 0 : i32
    return %arg0, %c0_i32 : i32, i32
  }
  func.func @transform_1(%arg0: i32) -> (i32, i32) {
    %c0_i32 = arith.constant 0 : i32
    %c0_i32_0 = arith.constant 0 : i32
    %c0_i32_1 = arith.constant 0 : i32
    return %c0_i32, %c0_i32_0 : i32, i32
  }
  func.func @transform_2(%arg0: i32) -> (i32, i32) {
    %c0_i32 = arith.constant 0 : i32
    %c0_i32_0 = arith.constant 0 : i32
    %c0_i32_1 = arith.constant 0 : i32
    return %c0_i32, %c0_i32_0 : i32, i32
  }
  func.func @transform_3(%arg0: i32) -> (i32, i32) {
    %c0_i32 = arith.constant 0 : i32
    %c0_i32_0 = arith.constant 0 : i32
    %c0_i32_1 = arith.constant 0 : i32
    return %c0_i32, %c0_i32_0 : i32, i32
  }
  func.func @transform_4(%arg0: i32) -> (i32, i32) {
    %c0_i32 = arith.constant 0 : i32
    %c0_i32_0 = arith.constant 0 : i32
    %c0_i32_1 = arith.constant 0 : i32
    return %c0_i32, %c0_i32_0 : i32, i32
  }
  func.func @transform_5(%arg0: i32) -> (i32, i32) {
    %c0_i32 = arith.constant 0 : i32
    %c0_i32_0 = arith.constant 0 : i32
    %c0_i32_1 = arith.constant 0 : i32
    return %c0_i32, %c0_i32_0 : i32, i32
  }
  func.func @transform_6(%arg0: i32) -> (i32, i32) {
    %c0_i32 = arith.constant 0 : i32
    %c0_i32_0 = arith.constant 0 : i32
    %c0_i32_1 = arith.constant 0 : i32
    return %c0_i32, %c0_i32_0 : i32, i32
  }
  func.func @transform_7(%arg0: i32) -> (i32, i32) {
    %c0_i32 = arith.constant 0 : i32
    %c0_i32_0 = arith.constant 0 : i32
    %c0_i32_1 = arith.constant 0 : i32
    return %c0_i32, %c0_i32_0 : i32, i32
  }
  func.func @transform_8(%arg0: i32) -> (i32, i32) {
    %c0_i32 = arith.constant 0 : i32
    %c0_i32_0 = arith.constant 0 : i32
    %c0_i32_1 = arith.constant 0 : i32
    return %c0_i32, %c0_i32_0 : i32, i32
  }
  func.func @transform_9(%arg0: i32) -> (i32, i32) {
    %c0_i32 = arith.constant 0 : i32
    %c0_i32_0 = arith.constant 0 : i32
    return %arg0, %c0_i32 : i32, i32
  }
}

</mosaic_0001>

<llo_original>
// kernel: dense1d_multi_forward.1
$region0: #{dense1d_multi_forward.1}
  #allocation0 [shape = 'u32[]', space=smem, size = 0x4, offset = 0x4, fixed_abs, tag = 'smem constant byte address 0x4 - core index']
  #allocation1 [shape = 'u32[144,128]{1,0:T(1,128)}', space=vmem, size = 0x12000, scoped, tag = 'internal scratch']
  %s0 = inlined_call_operand.vmem [shape: bf16[16,64], index: 0, kind: input, shape index: {}]
  %s1 = inlined_call_operand.vmem [shape: bf16[64,128], index: 1, kind: input, shape index: {}]
  %s2 = inlined_call_operand.vmem [shape: f32[1,128], index: 2, kind: input, shape index: {}]
  %s3 = inlined_call_operand.vmem [shape: bf16[128,128], index: 3, kind: input, shape index: {}]
  %s4 = inlined_call_operand.vmem [shape: f32[1,128], index: 4, kind: input, shape index: {}]
  %s5 = inlined_call_operand.vmem [shape: bf16[128,128], index: 5, kind: input, shape index: {}]
  %s6 = inlined_call_operand.vmem [shape: f32[1,128], index: 6, kind: input, shape index: {}]
  %s7 = inlined_call_operand.vmem [shape: f32[1,128], index: 7, kind: input, shape index: {}]
  %s8 = inlined_call_operand.vmem [shape: f32[1,128], index: 8, kind: input, shape index: {}]
  %s9 = inlined_call_operand.vmem [shape: f32[16,128], index: 9, kind: output, shape index: {}]
  %s10 = sld [smem:[#allocation0]]
  $region46: #{dense1d_multi_forward.1} parent=0
    _
  %s12 = ssub.s32 1, %s10
  %s13 = scalar_select 0, %s12, %s10
  // Predicated region
  $region2: #{dense1d_multi_forward.1} parent=0 // pred_check
    _
  $region3: #{dense1d_multi_forward.1} parent=0 // pred_check_branch
    %15 = sbr.rel (0) target = $region5
  $region4: #{dense1d_multi_forward.1} parent=0 // pred_region
    _
  $region5: #{dense1d_multi_forward.1} parent=0 // pred_fallthru
    _
  // Predicated region
  $region6: #{dense1d_multi_forward.1} parent=0 // pred_check
    _
  $region7: #{dense1d_multi_forward.1} parent=0 // pred_check_branch
    %17 = sbr.rel (0) target = $region9
  $region8: #{dense1d_multi_forward.1} parent=0 // pred_region
    _
  $region9: #{dense1d_multi_forward.1} parent=0 // pred_fallthru
    _
  // Predicated region
  $region10: #{dense1d_multi_forward.1} parent=0 // pred_check
    _
  $region11: #{dense1d_multi_forward.1} parent=0 // pred_check_branch
    %19 = sbr.rel (0) target = $region13
  $region12: #{dense1d_multi_forward.1} parent=0 // pred_region
    _
  $region13: #{dense1d_multi_forward.1} parent=0 // pred_fallthru
    _
  // Predicated region
  $region14: #{dense1d_multi_forward.1} parent=0 // pred_check
    _
  $region15: #{dense1d_multi_forward.1} parent=0 // pred_check_branch
    %21 = sbr.rel (0) target = $region17
  $region16: #{dense1d_multi_forward.1} parent=0 // pred_region
    _
  $region17: #{dense1d_multi_forward.1} parent=0 // pred_fallthru
    _
  // Predicated region
  $region18: #{dense1d_multi_forward.1} parent=0 // pred_check
    _
  $region19: #{dense1d_multi_forward.1} parent=0 // pred_check_branch
    %23 = sbr.rel (0) target = $region21
  $region20: #{dense1d_multi_forward.1} parent=0 // pred_region
    _
  $region21: #{dense1d_multi_forward.1} parent=0 // pred_fallthru
    _
  // Predicated region
  $region22: #{dense1d_multi_forward.1} parent=0 // pred_check
    _
  $region23: #{dense1d_multi_forward.1} parent=0 // pred_check_branch
    %25 = sbr.rel (0) target = $region25
  $region24: #{dense1d_multi_forward.1} parent=0 // pred_region
    _
  $region25: #{dense1d_multi_forward.1} parent=0 // pred_fallthru
    _
  // Predicated region
  $region26: #{dense1d_multi_forward.1} parent=0 // pred_check
    _
  $region27: #{dense1d_multi_forward.1} parent=0 // pred_check_branch
    %27 = sbr.rel (0) target = $region29
  $region28: #{dense1d_multi_forward.1} parent=0 // pred_region
    _
  $region29: #{dense1d_multi_forward.1} parent=0 // pred_fallthru
    _
  // Predicated region
  $region30: #{dense1d_multi_forward.1} parent=0 // pred_check
    _
  $region31: #{dense1d_multi_forward.1} parent=0 // pred_check_branch
    %29 = sbr.rel (0) target = $region33
  $region32: #{dense1d_multi_forward.1} parent=0 // pred_region
    _
  $region33: #{dense1d_multi_forward.1} parent=0 // pred_fallthru
    _
  // Predicated region
  $region34: #{dense1d_multi_forward.1} parent=0 // pred_check
    _
  $region35: #{dense1d_multi_forward.1} parent=0 // pred_check_branch
    %31 = sbr.rel (0) target = $region37
  $region36: #{dense1d_multi_forward.1} parent=0 // pred_region
    _
  $region37: #{dense1d_multi_forward.1} parent=0 // pred_fallthru
    _
  %v33 = vld [vmem:[%s0] sm:$0xf]
  %v34 = vld [vmem:[%s0 + $0x4] sm:$0xf]
  %v35 = vld [vmem:[%s1] sm:$0xf]
  %v36 = vld [vmem:[%s1 + $0x4] sm:$0xf]
  %v37 = vld [vmem:[%s1 + $0x8] sm:$0xf]
  %v38 = vld [vmem:[%s1 + $0xc] sm:$0xf]
  %v39 = vld [vmem:[%s1 + $0x10] sm:$0xf]
  %v40 = vld [vmem:[%s1 + $0x14] sm:$0xf]
  %v41 = vld [vmem:[%s1 + $0x18] sm:$0xf]
  %v42 = vld [vmem:[%s1 + $0x1c] sm:$0xf]
  %v43 = vld [vmem:[%s2] sm:$0x1]
  %v45 = vlaneseq
  %v46 = vshrl.u32 %v45, 7
  %v47 = vsub.s32 0, %v46
  %v48 = vrot.slane %v43, %v47
  %v52 = vunpack.c.l.b16 %v33
  %v53 = vunpack.c.l.b16 %v34
  %v54 = vpack.c.b16 %v53, %v52
  %v63 = vunpack.c.l.b16 %v35
  %v64 = vunpack.c.l.b16 %v36
  %v65 = vunpack.c.l.b16 %v37
  %v66 = vunpack.c.l.b16 %v38
  %v67 = vunpack.c.l.b16 %v39
  %v68 = vunpack.c.l.b16 %v40
  %v69 = vunpack.c.l.b16 %v41
  %v70 = vunpack.c.l.b16 %v42
  %v71 = vpack.c.b16 %v64, %v63
  %v72 = vpack.c.b16 %v66, %v65
  %v73 = vpack.c.b16 %v68, %v67
  %v74 = vpack.c.b16 %v70, %v69
  %vm79 = vcmask 523264
  %v81 = vsel %vm79, %v54, 0
  %83 = vmatprep.subr.bf16.mxu0 0
  %84 = vmatpush1.bf16.msra.mxu0 0
  %85 = vmatprep.subr.bf16.mxu0 0
  %86 = vmatpush1.bf16.msra.mxu0 0
  %87 = vmatprep.subr.bf16.mxu0 0
  %88 = vmatpush1.bf16.msra.mxu0 0
  %89 = vmatprep.subr.bf16.mxu0 0
  %90 = vmatpush1.bf16.msra.mxu0 0
  %91 = vmatprep.subr.bf16.mxu0 0
  %92 = vmatpush1.bf16.msra.mxu0 %v74
  %93 = vmatprep.subr.bf16.mxu0 0
  %94 = vmatpush1.bf16.msra.mxu0 %v73
  %95 = vmatprep.subr.bf16.mxu0 0
  %96 = vmatpush1.bf16.msra.mxu0 %v72
  %97 = vmatprep.subr.bf16.mxu0 0
  %98 = vmatpush1.bf16.msra.mxu0 %v71
  %99 = vmatprep.subr.bf16.mxu0 0
  %100 = vmatpush2.bf16.msra.mxu0 0
  %101 = vmatprep.subr.bf16.mxu0 0
  %102 = vmatpush2.bf16.msra.mxu0 0
  %103 = vmatprep.subr.bf16.mxu0 0
  %104 = vmatpush2.bf16.msra.mxu0 0
  %105 = vmatprep.subr.bf16.mxu0 0
  %106 = vmatpush2.bf16.msra.mxu0 0
  %107 = vmatprep.subr.bf16.mxu0 0
  %108 = vmatpush2.bf16.msra.mxu0 0
  %109 = vmatprep.subr.bf16.mxu0 0
  %110 = vmatpush2.bf16.msra.mxu0 0
  %111 = vmatprep.subr.bf16.mxu0 0
  %112 = vmatpush2.bf16.msra.mxu0 0
  %113 = vmatprep.subr.bf16.mxu0 0
  %114 = vmatpush2.bf16.msra.mxu0 0
  %115 = vmatprep.mubr.bf16.mxu0 0
  %116 = vmatmul.mubr.bf16.gmra.mxu0 %v81
  %v117 = vpop.f32.mrf.mxu0
  %v118 = vadd.f32 %v48, %v117
  %v119 = vpop.f32.mrf.mxu0
  %v120 = vpop.f32.mrf.mxu0
  %v121 = vadd.f32 %v48, %v120
  %v122 = vpop.f32.mrf.mxu0
  %123 = vdwg.mxu0
  %v124 = vmax.f32 %v118, 0.0
  %v125 = vmax.f32 %v121, 0.0
  %v126 = vpack.c.bf16 %v125, %v124
  %v127 = vld [vmem:[%s3] sm:$0xf]
  %v128 = vld [vmem:[%s3 + $0x4] sm:$0xf]
  %v129 = vld [vmem:[%s3 + $0x8] sm:$0xf]
  %v130 = vld [vmem:[%s3 + $0xc] sm:$0xf]
  %v131 = vld [vmem:[%s3 + $0x10] sm:$0xf]
  %v132 = vld [vmem:[%s3 + $0x14] sm:$0xf]
  %v133 = vld [vmem:[%s3 + $0x18] sm:$0xf]
  %v134 = vld [vmem:[%s3 + $0x1c] sm:$0xf]
  %v135 = vld [vmem:[%s3 + $0x20] sm:$0xf]
  %v136 = vld [vmem:[%s3 + $0x24] sm:$0xf]
  %v137 = vld [vmem:[%s3 + $0x28] sm:$0xf]
  %v138 = vld [vmem:[%s3 + $0x2c] sm:$0xf]
  %v139 = vld [vmem:[%s3 + $0x30] sm:$0xf]
  %v140 = vld [vmem:[%s3 + $0x34] sm:$0xf]
  %v141 = vld [vmem:[%s3 + $0x38] sm:$0xf]
  %v142 = vld [vmem:[%s3 + $0x3c] sm:$0xf]
  %v143 = vld [vmem:[%s4] sm:$0x1]
  %v145 = vlaneseq
  %v146 = vshrl.u32 %v145, 7
  %v147 = vsub.s32 0, %v146
  %v148 = vrot.slane %v143, %v147
  %v166 = vunpack.c.l.b16 %v127
  %v167 = vunpack.c.l.b16 %v128
  %v168 = vunpack.c.l.b16 %v129
  %v169 = vunpack.c.l.b16 %v130
  %v170 = vunpack.c.l.b16 %v131
  %v171 = vunpack.c.l.b16 %v132
  %v172 = vunpack.c.l.b16 %v133
  %v173 = vunpack.c.l.b16 %v134
  %v174 = vunpack.c.l.b16 %v135
  %v175 = vunpack.c.l.b16 %v136
  %v176 = vunpack.c.l.b16 %v137
  %v177 = vunpack.c.l.b16 %v138
  %v178 = vunpack.c.l.b16 %v139
  %v179 = vunpack.c.l.b16 %v140
  %v180 = vunpack.c.l.b16 %v141
  %v181 = vunpack.c.l.b16 %v142
  %v182 = vpack.c.b16 %v167, %v166
  %v183 = vpack.c.b16 %v169, %v168
  %v184 = vpack.c.b16 %v171, %v170
  %v185 = vpack.c.b16 %v173, %v172
  %v186 = vpack.c.b16 %v175, %v174
  %v187 = vpack.c.b16 %v177, %v176
  %v188 = vpack.c.b16 %v179, %v178
  %v189 = vpack.c.b16 %v181, %v180
  %198 = vmatprep.subr.bf16.mxu0 0
  %199 = vmatpush1.bf16.msra.mxu0 %v189
  %200 = vmatprep.subr.bf16.mxu0 0
  %201 = vmatpush1.bf16.msra.mxu0 %v188
  %202 = vmatprep.subr.bf16.mxu0 0
  %203 = vmatpush1.bf16.msra.mxu0 %v187
  %204 = vmatprep.subr.bf16.mxu0 0
  %205 = vmatpush1.bf16.msra.mxu0 %v186
  %206 = vmatprep.subr.bf16.mxu0 0
  %207 = vmatpush1.bf16.msra.mxu0 %v185
  %208 = vmatprep.subr.bf16.mxu0 0
  %209 = vmatpush1.bf16.msra.mxu0 %v184
  %210 = vmatprep.subr.bf16.mxu0 0
  %211 = vmatpush1.bf16.msra.mxu0 %v183
  %212 = vmatprep.subr.bf16.mxu0 0
  %213 = vmatpush1.bf16.msra.mxu0 %v182
  %214 = vmatprep.subr.bf16.mxu0 0
  %215 = vmatpush2.bf16.msra.mxu0 0
  %216 = vmatprep.subr.bf16.mxu0 0
  %217 = vmatpush2.bf16.msra.mxu0 0
  %218 = vmatprep.subr.bf16.mxu0 0
  %219 = vmatpush2.bf16.msra.mxu0 0
  %220 = vmatprep.subr.bf16.mxu0 0
  %221 = vmatpush2.bf16.msra.mxu0 0
  %222 = vmatprep.subr.bf16.mxu0 0
  %223 = vmatpush2.bf16.msra.mxu0 0
  %224 = vmatprep.subr.bf16.mxu0 0
  %225 = vmatpush2.bf16.msra.mxu0 0
  %226 = vmatprep.subr.bf16.mxu0 0
  %227 = vmatpush2.bf16.msra.mxu0 0
  %228 = vmatprep.subr.bf16.mxu0 0
  %229 = vmatpush2.bf16.msra.mxu0 0
  %230 = vmatprep.mubr.bf16.mxu0 0
  %231 = vmatmul.mubr.bf16.gmra.mxu0 %v126
  %v232 = vpop.f32.mrf.mxu0
  %v233 = vadd.f32 %v148, %v232
  %v234 = vpop.f32.mrf.mxu0
  %v235 = vpop.f32.mrf.mxu0
  %v236 = vadd.f32 %v148, %v235
  %v237 = vpop.f32.mrf.mxu0
  %238 = vdwg.mxu0
  %v239 = vmax.f32 %v233, 0.0
  %v240 = vmax.f32 %v236, 0.0
  %v241 = vpack.c.bf16 %v240, %v239
  %v242 = vld [vmem:[%s5] sm:$0xf]
  %v243 = vld [vmem:[%s5 + $0x4] sm:$0xf]
  %v244 = vld [vmem:[%s5 + $0x8] sm:$0xf]
  %v245 = vld [vmem:[%s5 + $0xc] sm:$0xf]
  %v246 = vld [vmem:[%s5 + $0x10] sm:$0xf]
  %v247 = vld [vmem:[%s5 + $0x14] sm:$0xf]
  %v248 = vld [vmem:[%s5 + $0x18] sm:$0xf]
  %v249 = vld [vmem:[%s5 + $0x1c] sm:$0xf]
  %v250 = vld [vmem:[%s5 + $0x20] sm:$0xf]
  %v251 = vld [vmem:[%s5 + $0x24] sm:$0xf]
  %v252 = vld [vmem:[%s5 + $0x28] sm:$0xf]
  %v253 = vld [vmem:[%s5 + $0x2c] sm:$0xf]
  %v254 = vld [vmem:[%s5 + $0x30] sm:$0xf]
  %v255 = vld [vmem:[%s5 + $0x34] sm:$0xf]
  %v256 = vld [vmem:[%s5 + $0x38] sm:$0xf]
  %v257 = vld [vmem:[%s5 + $0x3c] sm:$0xf]
  %v258 = vld [vmem:[%s6] sm:$0x1]
  %v260 = vlaneseq
  %v261 = vshrl.u32 %v260, 7
  %v262 = vsub.s32 0, %v261
  %v263 = vrot.slane %v258, %v262
  %v281 = vunpack.c.l.b16 %v242
  %v282 = vunpack.c.l.b16 %v243
  %v283 = vunpack.c.l.b16 %v244
  %v284 = vunpack.c.l.b16 %v245
  %v285 = vunpack.c.l.b16 %v246
  %v286 = vunpack.c.l.b16 %v247
  %v287 = vunpack.c.l.b16 %v248
  %v288 = vunpack.c.l.b16 %v249
  %v289 = vunpack.c.l.b16 %v250
  %v290 = vunpack.c.l.b16 %v251
  %v291 = vunpack.c.l.b16 %v252
  %v292 = vunpack.c.l.b16 %v253
  %v293 = vunpack.c.l.b16 %v254
  %v294 = vunpack.c.l.b16 %v255
  %v295 = vunpack.c.l.b16 %v256
  %v296 = vunpack.c.l.b16 %v257
  %v297 = vpack.c.b16 %v282, %v281
  %v298 = vpack.c.b16 %v284, %v283
  %v299 = vpack.c.b16 %v286, %v285
  %v300 = vpack.c.b16 %v288, %v287
  %v301 = vpack.c.b16 %v290, %v289
  %v302 = vpack.c.b16 %v292, %v291
  %v303 = vpack.c.b16 %v294, %v293
  %v304 = vpack.c.b16 %v296, %v295
  %313 = vmatprep.subr.bf16.mxu0 0
  %314 = vmatpush1.bf16.msra.mxu0 %v304
  %315 = vmatprep.subr.bf16.mxu0 0
  %316 = vmatpush1.bf16.msra.mxu0 %v303
  %317 = vmatprep.subr.bf16.mxu0 0
  %318 = vmatpush1.bf16.msra.mxu0 %v302
  %319 = vmatprep.subr.bf16.mxu0 0
  %320 = vmatpush1.bf16.msra.mxu0 %v301
  %321 = vmatprep.subr.bf16.mxu0 0
  %322 = vmatpush1.bf16.msra.mxu0 %v300
  %323 = vmatprep.subr.bf16.mxu0 0
  %324 = vmatpush1.bf16.msra.mxu0 %v299
  %325 = vmatprep.subr.bf16.mxu0 0
  %326 = vmatpush1.bf16.msra.mxu0 %v298
  %327 = vmatprep.subr.bf16.mxu0 0
  %328 = vmatpush1.bf16.msra.mxu0 %v297
  %329 = vmatprep.subr.bf16.mxu0 0
  %330 = vmatpush2.bf16.msra.mxu0 0
  %331 = vmatprep.subr.bf16.mxu0 0
  %332 = vmatpush2.bf16.msra.mxu0 0
  %333 = vmatprep.subr.bf16.mxu0 0
  %334 = vmatpush2.bf16.msra.mxu0 0
  %335 = vmatprep.subr.bf16.mxu0 0
  %336 = vmatpush2.bf16.msra.mxu0 0
  %337 = vmatprep.subr.bf16.mxu0 0
  %338 = vmatpush2.bf16.msra.mxu0 0
  %339 = vmatprep.subr.bf16.mxu0 0
  %340 = vmatpush2.bf16.msra.mxu0 0
  %341 = vmatprep.subr.bf16.mxu0 0
  %342 = vmatpush2.bf16.msra.mxu0 0
  %343 = vmatprep.subr.bf16.mxu0 0
  %344 = vmatpush2.bf16.msra.mxu0 0
  %345 = vmatprep.mubr.bf16.mxu0 0
  %346 = vmatmul.mubr.bf16.gmra.mxu0 %v241
  %v347 = vpop.f32.mrf.mxu0
  %v348 = vadd.f32 %v263, %v347
  %v349 = vpop.f32.mrf.mxu0
  %v350 = vpop.f32.mrf.mxu0
  %v351 = vadd.f32 %v263, %v350
  %v352 = vpop.f32.mrf.mxu0
  %353 = vdwg.mxu0
  %v354 = vmax.f32 %v348, 0.0
  %v355 = vmax.f32 %v351, 0.0
  %v356 = vld [vmem:[%s7] sm:$0x1]
  %v358 = vlaneseq
  %v359 = vshrl.u32 %v358, 7
  %v360 = vsub.s32 0, %v359
  %v361 = vrot.slane %v356, %v360
  %v363 = vmul.f32 %v354, %v361
  %v364 = vmul.f32 %v355, %v361
  %v365 = vld [vmem:[%s8] sm:$0x1]
  %v367 = vlaneseq
  %v368 = vshrl.u32 %v367, 7
  %v369 = vsub.s32 0, %v368
  %v370 = vrot.slane %v365, %v369
  %v372 = vadd.f32 %v363, %v370
  %v373 = vadd.f32 %v364, %v370
  %374 = vst [vmem:[%s9] sm:$0xff] %v372
  %375 = vst [vmem:[%s9 + $0x8] sm:$0xff] %v373
  // Predicated region
  $region38: #{dense1d_multi_forward.1} parent=0 // pred_check
    _
  $region39: #{dense1d_multi_forward.1} parent=0 // pred_check_branch
    %377 = sbr.rel (0) target = $region41
  $region40: #{dense1d_multi_forward.1} parent=0 // pred_region
    _
  $region41: #{dense1d_multi_forward.1} parent=0 // pred_fallthru
    _
  // Predicated region
  $region42: #{dense1d_multi_forward.1} parent=0 // pred_check
    _
  $region43: #{dense1d_multi_forward.1} parent=0 // pred_check_branch
    %379 = sbr.rel (0) target = $region45
  $region44: #{dense1d_multi_forward.1} parent=0 // pred_region
    _
  $region45: #{dense1d_multi_forward.1} parent=0 // pred_fallthru
    _

</llo_original>
